<compile_context>
chip_gen: v7x
topology: tpu7x:2x2x1
jax: 0.10.0
libtpu: 0.0.40
codegen_flags: <defaults>
</compile_context>

<pallas_src>
import jax
import jax.numpy as jnp
from jax.experimental import pallas as pl
from jax.experimental.pallas import tpu as pltpu


def _make_gelu_kernel(compute_dtype):
    def _kernel(x_ref, o_ref):
        x = x_ref[...].astype(compute_dtype)
        # sigmoid(1.702*x) == 0.5 * (1 + tanh(0.851*x))  -> single EUP op (tanh)
        sig = 0.5 * jnp.tanh(0.851 * x) + 0.5
        o_ref[...] = (x * sig).astype(o_ref.dtype)
    return _kernel


def _sublane_min(dtype) -> int:
    # f32/i32 -> 8, bf16/f16 -> 16, int8/fp8 -> 32
    itemsize = jnp.dtype(dtype).itemsize
    return max(8, 32 // itemsize)


def _tpu_block_config():
    """Generation-aware (target_block_bytes, vmem_limit_bytes)."""
    vmem_cap = None
    try:
        info = pltpu.get_tpu_info()
        vmem_cap = getattr(info, "vmem_capacity_bytes", None)
    except Exception:
        vmem_cap = None
    if vmem_cap is not None and vmem_cap >= 100 * 1024 * 1024:
        # v5e / v6e: 128 MiB physical VMEM -> larger streaming blocks.
        return 12 * 1024 * 1024, 64 * 1024 * 1024
    # v7x (64 MiB VMEM) or unknown generation: conservative but still big
    # enough to amortize the ~0.35 us per-grid-step overhead at 3.2 TB/s HBM.
    return 8 * 1024 * 1024, 48 * 1024 * 1024


def gelu_pallas(x: jax.Array, *, target_block_bytes=None, vmem_limit_bytes=None) -> jax.Array:
    """x * sigmoid(1.702 * x), elementwise, via a Pallas TPU kernel."""
    orig_shape = x.shape
    orig_dtype = x.dtype
    n = x.size
    if n == 0:
        return x

    itemsize = jnp.dtype(orig_dtype).itemsize
    sub_min = _sublane_min(orig_dtype)

    if target_block_bytes is None or vmem_limit_bytes is None:
        blk, lim = _tpu_block_config()
        target_block_bytes = blk if target_block_bytes is None else target_block_bytes
        vmem_limit_bytes = lim if vmem_limit_bytes is None else vmem_limit_bytes

    # bf16/f16 stay native (bf16 VPU/EUP on v6e/v7x; Mosaic upcasts on v5e),
    # everything else computes in f32.
    if jnp.dtype(orig_dtype).name in ("bfloat16", "float16"):
        compute_dtype = orig_dtype
    else:
        compute_dtype = jnp.float32

    # Pick the widest lane width (multiple of 128) that divides n -> no padding.
    lane = None
    for cand in (1024, 512, 256, 128):
        if n % cand == 0:
            lane = cand
            break

    flat = x.reshape(-1)
    tail = None
    if lane is not None:
        main = flat
        rows = n // lane
    else:
        # Non-divisible size: run the kernel on the divisible prefix only and
        # finish the (<128 element) tail with plain jnp — no full-array pad/slice.
        lane = 128
        n_main = (n // lane) * lane
        rows = n_main // lane
        if rows == 0:
            y = flat * jax.nn.sigmoid(1.702 * flat)
            return y.astype(orig_dtype).reshape(orig_shape)
        main = flat[:n_main]
        tail = flat[n_main:]

    x2d = main.reshape(rows, lane)

    # Row tile: ~target_block_bytes per block, multiple of the dtype sublane
    # minimum. If the whole array would fit in one block, still split into two
    # blocks (when legal) so v7x's two TensorCores both get work.
    max_trows = target_block_bytes // (lane * itemsize)
    trows = min(rows, max(sub_min, (max_trows // sub_min) * sub_min))
    if trows >= rows:
        if rows >= 2 * sub_min:
            half = (rows + 1) // 2
            trows = ((half + sub_min - 1) // sub_min) * sub_min
        else:
            trows = rows  # full-array block shape is always legal
    grid = (pl.cdiv(rows, trows),)  # ragged last block: Pallas masks the stores

    out2d = pl.pallas_call(
        _make_gelu_kernel(compute_dtype),
        out_shape=jax.ShapeDtypeStruct((rows, lane), orig_dtype),
        grid_spec=pltpu.PrefetchScalarGridSpec(
            num_scalar_prefetch=0,
            grid=grid,
            in_specs=[pl.BlockSpec((trows, lane), lambda i: (i, 0))],
            out_specs=pl.BlockSpec((trows, lane), lambda i: (i, 0)),
        ),
        compiler_params=pltpu.CompilerParams(
            dimension_semantics=("parallel",),
            vmem_limit_bytes=vmem_limit_bytes,
        ),
    )(x2d)

    y = out2d.reshape(-1)
    if tail is not None:
        t = tail.astype(compute_dtype)
        y_tail = (t * jax.nn.sigmoid(1.702 * t)).astype(orig_dtype)
        y = jnp.concatenate([y, y_tail])
    return y.reshape(orig_shape)


def gelu_ref(x):
    return x * jax.nn.sigmoid(1.702 * x)


if __name__ == "__main__":
    key = jax.random.PRNGKey(0)
    # NCHW activation tensor: batch=2, channels=4, 16x16 spatial.
    x = jax.random.normal(key, (2, 4, 16, 16), dtype=jnp.float32)

    y = jax.block_until_ready(gelu_pallas(x))

    y_ref = gelu_ref(x)
    assert y.shape == x.shape and y.dtype == x.dtype
    # Exact tanh-based sigmoid (no approx reciprocal) -> tight tolerance.
    assert jnp.allclose(y, y_ref, atol=1e-4, rtol=1e-4), "mismatch vs reference"

    print("KERNEL_OK")
</pallas_src>

<mosaic_0001>
module attributes {stable_mosaic.version = 11 : i64} {
  func.func @_kernel(%arg0: i32, %arg1: memref<2x1024xf32, #tpu.memory_space<vmem>>, %arg2: memref<2x1024xf32, #tpu.memory_space<vmem>>) attributes {dimension_semantics = [#tpu.dimension_semantics<parallel>], iteration_bounds = array<i64: 1>, scalar_prefetch = 0 : i64, scratch_operands = 0 : i64, tpu.core_type = #tpu.core_type<tc>, window_params = [{transform_indices = @transform_0, window_bounds = array<i64: 2, 1024>}, {transform_indices = @transform_1, window_bounds = array<i64: 2, 1024>}]} {
    %c0 = arith.constant 0 : index
    %c0_0 = arith.constant 0 : index
    %0 = vector.load %arg1[%c0, %c0_0] : memref<2x1024xf32, #tpu.memory_space<vmem>>, vector<2x1024xf32>
    %cst = arith.constant 8.510000e-01 : f32
    %1 = vector.broadcast %cst : f32 to vector<2x1024xf32>
    %2 = arith.mulf %1, %0 : vector<2x1024xf32>
    %3 = math.tanh %2 : vector<2x1024xf32>
    %cst_1 = arith.constant 5.000000e-01 : f32
    %4 = vector.broadcast %cst_1 : f32 to vector<2x1024xf32>
    %5 = arith.mulf %4, %3 : vector<2x1024xf32>
    %cst_2 = arith.constant 5.000000e-01 : f32
    %6 = vector.broadcast %cst_2 : f32 to vector<2x1024xf32>
    %7 = arith.addf %5, %6 : vector<2x1024xf32>
    %8 = arith.mulf %0, %7 : vector<2x1024xf32>
    %c0_3 = arith.constant 0 : index
    %c0_4 = arith.constant 0 : index
    %9 = vector.load %arg2[%c0_3, %c0_4] : memref<2x1024xf32, #tpu.memory_space<vmem>>, vector<2x1024xf32>
    tpu.vector_store %arg2[%c0_3, %c0_4], %8 {strides = array<i32>} : memref<2x1024xf32, #tpu.memory_space<vmem>>, vector<2x1024xf32>,
    return
  }
  func.func @transform_0(%arg0: i32) -> (i32, i32) {
    %c0_i32 = arith.constant 0 : i32
    %c0_i32_0 = arith.constant 0 : i32
    return %arg0, %c0_i32 : i32, i32
  }
  func.func @transform_1(%arg0: i32) -> (i32, i32) {
    %c0_i32 = arith.constant 0 : i32
    %c0_i32_0 = arith.constant 0 : i32
    return %arg0, %c0_i32 : i32, i32
  }
}

</mosaic_0001>

<llo_original>
// kernel: tpu_custom_call.1
$region0: #{tpu_custom_call.1}
  #allocation0 [shape = 'u32[]', space=smem, size = 0x4, offset = 0x4, fixed_abs, tag = 'smem constant byte address 0x4 - core index']
  #allocation1 [shape = 'u32[144,128]{1,0:T(1,128)}', space=vmem, size = 0x12000, scoped, tag = 'internal scratch']
  %s0 = inlined_call_operand.hbm [shape: f32[2,1024], index: 0, kind: input, shape index: {}]
  %s1 = inlined_call_operand.hbm [shape: f32[2,1024], index: 1, kind: output, shape index: {}]
  %s2 = sld [smem:[#allocation0]]
  $region18: #{tpu_custom_call.1} parent=0
    _
  %s4 = ssub.s32 1, %s2
  %s5 = scalar_select 0, %s4, %s2
  $region1: #{tpu_custom_call.1} parent=0
    #allocation2 [shape = 'u8[8192]{0}', space=vmem, size = 0x2000, scoped, tag = 'input window, operand 0, single buffered']
    #allocation3 [shape = 's32[1]{0}', space=sflag, size = 0x4, scoped, tag = 'scoped memory for tpu_custom_call.1']
    #allocation4 [shape = 's32[1]{0}', space=sflag, size = 0x4, scoped, tag = 'scoped memory for tpu_custom_call.1']
    #allocation5 [shape = 'u8[8192]{0}', space=vmem, size = 0x2000, scoped, tag = 'output window, operand 0, single buffered']
    %6 = vsyncpa [#allocation3], 0
    %7 = vsyncpa [#allocation4], 0
    // Predicated region
    $region2: #{tpu_custom_call.1} parent=1 // pred_check
      _
    $region3: #{tpu_custom_call.1} parent=1 // pred_check_branch
      %9 = sbr.rel (0) target = $region5
    $region4: #{tpu_custom_call.1} parent=1 // pred_region
      %s11 = ssub.s32 256, 256
      %12 = vsyncadd [#allocation3], %s11
      %s14 = sshll.u32 [#allocation2], 4
      %s15 = int_to_ptr.vmem [resolvable:$true] %s14
      %17 = dma.hbm_to_vmem [thread:$0]  %s0, 256, %s15, [#allocation3]
    $region5: #{tpu_custom_call.1} parent=1 // pred_fallthru
      _
    // Predicated region
    $region6: #{tpu_custom_call.1} parent=1 // pred_check
      _
    $region7: #{tpu_custom_call.1} parent=1 // pred_check_branch
      %19 = sbr.rel (0) target = $region9
    $region8: #{tpu_custom_call.1} parent=1 // pred_region
      %20 = dma.done [#allocation3], 256
    $region9: #{tpu_custom_call.1} parent=1 // pred_fallthru
      _
    %v21 = vld [vmem:[#allocation2] sm:$0xff]
    %v22 = vld [vmem:[#allocation2 + $0x8] sm:$0xff]
    %v23 = vmul.f32 %v21, 0.851
    %v24 = vmul.f32 %v22, 0.851
    %v25 = vtanh.pop %v23
    %v26 = vtanh.pop %v24
    %v27 = vmul.f32 %v25, 0.5
    %v28 = vmul.f32 %v26, 0.5
    %v29 = vadd.f32 %v27, 0.5
    %v30 = vadd.f32 %v28, 0.5
    %v31 = vmul.f32 %v21, %v29
    %v32 = vmul.f32 %v22, %v30
    %33 = vst [vmem:[#allocation5] sm:$0xff] %v31
    %34 = vst [vmem:[#allocation5 + $0x8] sm:$0xff] %v32
    // Predicated region
    $region10: #{tpu_custom_call.1} parent=1 // pred_check
      _
    $region11: #{tpu_custom_call.1} parent=1 // pred_check_branch
      %36 = sbr.rel (0) target = $region13
    $region12: #{tpu_custom_call.1} parent=1 // pred_region
      %s38 = ssub.s32 256, 256
      %39 = vsyncadd [#allocation4], %s38
      %s41 = sshll.u32 [#allocation5], 4
      %s42 = int_to_ptr.vmem [resolvable:$true] %s41
      %44 = dma.vmem_to_hbm [thread:$0]  %s42, 256, %s1, [#allocation4]
    $region13: #{tpu_custom_call.1} parent=1 // pred_fallthru
      _
    // Predicated region
    $region14: #{tpu_custom_call.1} parent=1 // pred_check
      _
    $region15: #{tpu_custom_call.1} parent=1 // pred_check_branch
      %46 = sbr.rel (0) target = $region17
    $region16: #{tpu_custom_call.1} parent=1 // pred_region
      %47 = dma.done [#allocation4], 256
    $region17: #{tpu_custom_call.1} parent=1 // pred_fallthru
      _
    %48 = vsyncpa [#allocation3], 1
    %49 = vsyncpa [#allocation4], 1

</llo_original>
